<compile_context>
chip_gen: v6e
topology: v6e:2x2x1
jax: 0.10.0
libtpu: 0.0.40
codegen_flags: <defaults>
</compile_context>

<pallas_src>
import jax
import jax.numpy as jnp
from jax import lax
from jax.experimental import pallas as pl
from jax.experimental.pallas import tpu as pltpu


def _rmsnorm_kernel(x_ref, g_ref, o_ref):
    # x_ref: (n_blk, C, hw_tile); g_ref: (1, C, 1) f32, pre-scaled by sqrt(C);
    # o_ref: (n_blk, C, hw_tile)
    xf = x_ref[...].astype(jnp.float32)               # f32 accumulation of squares
    sq = jnp.sum(xf * xf, axis=1, keepdims=True)      # (n_blk, 1, hw_tile) per pixel
    # max(||x||, 1e-12) semantics of F.normalize <=> clamp squared sum at 1e-24.
    # (Also keeps garbage OOB lanes of partial blocks finite; their stores are masked.)
    inv = lax.rsqrt(jnp.maximum(sq, 1e-24))           # EUP rsqrt, per pixel only
    # Keep everything in f32, cast exactly once at the store (accuracy + v5e speed).
    o_ref[...] = (xf * (g_ref[...] * inv)).astype(o_ref.dtype)


def _vmem_budget():
    """(target_block_bytes, vmem_limit_bytes) per chip generation."""
    try:
        cap = pltpu.get_tpu_info().vmem_capacity_bytes
    except Exception:
        cap = 64 << 20  # conservative fallback (v7x-sized)
    if cap >= (96 << 20):          # v5e / v6e: 128 MiB physical VMEM
        return 8 << 20, 64 << 20   # ~4x block (in+out double-buffered) = 32 MiB
    # v7x: 64 MiB physical VMEM per TensorCore -> cap the budget.
    return 4 << 20, 40 << 20


def _choose_blocking(n: int, c: int, hw: int, itemsize: int, budget: int):
    """Pick (n_blk, hw_tile) with hw_tile a multiple of 128, under the budget."""
    ncols = pl.cdiv(hw, 128)                      # spatial extent in 128-lane columns
    col_bytes = max(1, c * itemsize * 128)        # bytes per 128-lane column
    max_cols = max(1, budget // col_bytes)
    tile_cols = min(ncols, max_cols)              # largest budgeted tile; accept a
                                                  # partial (masked) tail block.
    n_blk = 1
    if tile_cols == ncols:
        # A whole image fits in one block: batch images per block so DMAs stay
        # long and the ~0.35 us per-grid-step overhead is amortized.
        img_bytes = col_bytes * ncols
        n_blk = max(1, min(n, int(budget // img_bytes)))

    # v7x megacore: make sure there are >= 2 grid steps when possible so both
    # TensorCores get work.
    if pl.cdiv(n, n_blk) * pl.cdiv(ncols, tile_cols) < 2:
        if n_blk > 1:
            n_blk = pl.cdiv(n, 2)
        elif ncols >= 2:
            tile_cols = pl.cdiv(ncols, 2)
    return n_blk, tile_cols * 128


def rmsnorm_pallas(x_nchw: jax.Array, g: jax.Array):
    """RMSNorm forward. x_nchw: (N, C, H, W); g: (1, C, 1, 1)."""
    N, C, H, W = x_nchw.shape
    HW = H * W

    # Free reshape (no data movement): NCHW -> (N, C, HW).
    x3 = x_nchw.reshape(N, C, HW)
    # Hoist the C**0.5 scaling into the (tiny) gain once, in f32.
    g_scaled = g.reshape(1, C, 1).astype(jnp.float32) * (C ** 0.5)

    itemsize = jnp.dtype(x_nchw.dtype).itemsize
    target_block_bytes, vmem_limit = _vmem_budget()
    n_blk, hw_tile = _choose_blocking(N, C, HW, itemsize, target_block_bytes)

    grid = (pl.cdiv(N, n_blk), pl.cdiv(HW, hw_tile))

    out = pl.pallas_call(
        _rmsnorm_kernel,
        out_shape=jax.ShapeDtypeStruct((N, C, HW), x_nchw.dtype),
        grid_spec=pltpu.PrefetchScalarGridSpec(
            num_scalar_prefetch=0,
            grid=grid,
            in_specs=[
                pl.BlockSpec((n_blk, C, hw_tile), lambda n, j: (n, 0, j)),
                pl.BlockSpec((1, C, 1), lambda n, j: (0, 0, 0)),
            ],
            out_specs=pl.BlockSpec((n_blk, C, hw_tile), lambda n, j: (n, 0, j)),
        ),
        compiler_params=pltpu.CompilerParams(
            dimension_semantics=("parallel", "parallel"),
            vmem_limit_bytes=vmem_limit,
        ),
    )(x3, g_scaled)

    return out.reshape(N, C, H, W)


def rmsnorm_ref(x_nchw: jax.Array, g: jax.Array):
    """Pure-JAX reference matching F.normalize(x, dim=1) * g * C**0.5."""
    C = x_nchw.shape[1]
    xf = x_nchw.astype(jnp.float32)
    norm = jnp.sqrt(jnp.sum(xf * xf, axis=1, keepdims=True))
    norm = jnp.maximum(norm, 1e-12)
    y = xf / norm * g.astype(jnp.float32) * (C ** 0.5)
    return y.astype(x_nchw.dtype)


if __name__ == "__main__":
    key = jax.random.PRNGKey(0)

    # Small f32 case matching the module spec (batch=2, channels=4, spatial=16).
    N, C, H, W = 2, 4, 16, 16
    x = jax.random.normal(key, (N, C, H, W), dtype=jnp.float32)
    g = jnp.ones((1, C, 1, 1), dtype=jnp.float32)  # module init: g = ones(1, C, 1, 1)

    y = rmsnorm_pallas(x, g)
    y = jax.block_until_ready(y)
    y_ref = rmsnorm_ref(x, g)
    assert y.shape == (N, C, H, W)
    assert jnp.allclose(y, y_ref, atol=1e-5, rtol=1e-5), "mismatch vs reference (f32)"

    # Secondary check: larger C, bf16 input, ragged spatial extent (HW=64 < 128
    # exercises the masked partial-block path with no pad/slice HBM copies).
    key2 = jax.random.PRNGKey(1)
    N2, C2, H2, W2 = 1, 256, 8, 8
    x2 = jax.random.normal(key2, (N2, C2, H2, W2), dtype=jnp.bfloat16)
    g2 = jnp.ones((1, C2, 1, 1), dtype=jnp.float32)
    y2 = jax.block_until_ready(rmsnorm_pallas(x2, g2))
    y2_ref = rmsnorm_ref(x2, g2)
    assert y2.shape == (N2, C2, H2, W2)
    assert jnp.allclose(
        y2.astype(jnp.float32), y2_ref.astype(jnp.float32), atol=2e-2, rtol=2e-2
    ), "mismatch vs reference (bf16)"

    # Third check: ragged spatial tail with multiple tiles (f32, HW = 3*128+32)
    # to exercise a partial last block alongside full lane-dense blocks.
    key3 = jax.random.PRNGKey(2)
    N3, C3, H3, W3 = 2, 8, 13, 32   # HW = 416 = 3*128 + 32
    x3 = jax.random.normal(key3, (N3, C3, H3, W3), dtype=jnp.float32)
    g3 = jax.random.normal(jax.random.PRNGKey(3), (1, C3, 1, 1), dtype=jnp.float32)
    y3 = jax.block_until_ready(rmsnorm_pallas(x3, g3))
    y3_ref = rmsnorm_ref(x3, g3)
    assert jnp.allclose(y3, y3_ref, atol=1e-5, rtol=1e-5), "mismatch vs reference (ragged)"

    print("KERNEL_OK")
</pallas_src>

<mosaic_0001>
module attributes {stable_mosaic.version = 11 : i64} {
  func.func @_rmsnorm_kernel(%arg0: i32, %arg1: i32, %arg2: memref<1x4x256xf32, #tpu.memory_space<vmem>>, %arg3: memref<1x4x1xf32, #tpu.memory_space<vmem>>, %arg4: memref<1x4x256xf32, #tpu.memory_space<vmem>>) attributes {dimension_semantics = [#tpu.dimension_semantics<parallel>, #tpu.dimension_semantics<parallel>], iteration_bounds = array<i64: 2, 1>, scalar_prefetch = 0 : i64, scratch_operands = 0 : i64, tpu.core_type = #tpu.core_type<tc>, window_params = [{transform_indices = @transform_0, window_bounds = array<i64: 1, 4, 256>}, {pipeline_mode = #tpu.pipeline_mode<synchronous>, transform_indices = @transform_1, window_bounds = array<i64: 1, 4, 1>}, {transform_indices = @transform_2, window_bounds = array<i64: 1, 4, 256>}]} {
    %c0 = arith.constant 0 : index
    %c0_0 = arith.constant 0 : index
    %c0_1 = arith.constant 0 : index
    %0 = vector.load %arg2[%c0, %c0_0, %c0_1] : memref<1x4x256xf32, #tpu.memory_space<vmem>>, vector<1x4x256xf32>
    %1 = arith.mulf %0, %0 : vector<1x4x256xf32>
    %cst = arith.constant dense<0.000000e+00> : vector<1x256xf32>
    %2 = vector.multi_reduction <add>, %1, %cst [1] : vector<1x4x256xf32> to vector<1x256xf32>
    %3 = vector.shape_cast %2 : vector<1x256xf32> to vector<1x1x256xf32>
    %cst_2 = arith.constant 1.000000e-24 : f32
    %4 = vector.broadcast %cst_2 : f32 to vector<1x1x256xf32>
    %5 = arith.maximumf %3, %4 : vector<1x1x256xf32>
    %6 = math.rsqrt %5 : vector<1x1x256xf32>
    %c0_3 = arith.constant 0 : index
    %c0_4 = arith.constant 0 : index
    %c0_5 = arith.constant 0 : index
    %7 = vector.load %arg3[%c0_3, %c0_4, %c0_5] : memref<1x4x1xf32, #tpu.memory_space<vmem>>, vector<1x4x1xf32>
    %8 = vector.broadcast %7 : vector<1x4x1xf32> to vector<1x4x256xf32>
    %9 = vector.broadcast %6 : vector<1x1x256xf32> to vector<1x4x256xf32>
    %10 = arith.mulf %8, %9 : vector<1x4x256xf32>
    %11 = arith.mulf %0, %10 : vector<1x4x256xf32>
    %c0_6 = arith.constant 0 : index
    %c0_7 = arith.constant 0 : index
    %c0_8 = arith.constant 0 : index
    %12 = vector.load %arg4[%c0_6, %c0_7, %c0_8] : memref<1x4x256xf32, #tpu.memory_space<vmem>>, vector<1x4x256xf32>
    tpu.vector_store %arg4[%c0_6, %c0_7, %c0_8], %11 {strides = array<i32>} : memref<1x4x256xf32, #tpu.memory_space<vmem>>, vector<1x4x256xf32>,
    return
  }
  func.func @transform_0(%arg0: i32, %arg1: i32) -> (i32, i32, i32) {
    %c0_i32 = arith.constant 0 : i32
    %c0_i32_0 = arith.constant 0 : i32
    return %arg0, %c0_i32, %arg1 : i32, i32, i32
  }
  func.func @transform_1(%arg0: i32, %arg1: i32) -> (i32, i32, i32) {
    %c0_i32 = arith.constant 0 : i32
    %c0_i32_0 = arith.constant 0 : i32
    %c0_i32_1 = arith.constant 0 : i32
    %c0_i32_2 = arith.constant 0 : i32
    return %c0_i32, %c0_i32_0, %c0_i32_1 : i32, i32, i32
  }
  func.func @transform_2(%arg0: i32, %arg1: i32) -> (i32, i32, i32) {
    %c0_i32 = arith.constant 0 : i32
    %c0_i32_0 = arith.constant 0 : i32
    return %arg0, %c0_i32, %arg1 : i32, i32, i32
  }
}

</mosaic_0001>

<llo_original>
// kernel: tpu_custom_call.1
$region0: #{tpu_custom_call.1}
  #allocation0 [shape = 'u32[]', space=smem, size = 0x4, offset = 0x4, fixed_abs, tag = 'smem constant byte address 0x4 - core index']
  #allocation1 [shape = 'u32[144,128]{1,0:T(1,128)}', space=vmem, size = 0x12000, scoped, tag = 'internal scratch']
  %s0 = inlined_call_operand.hbm [shape: f32[2,4,256], index: 0, kind: input, shape index: {}]
  %s1 = inlined_call_operand.vmem [shape: f32[1,4,1], index: 1, kind: input, shape index: {}]
  %s2 = inlined_call_operand.hbm [shape: f32[2,4,256], index: 2, kind: output, shape index: {}]
  %s3 = sld [smem:[#allocation0]]
  $region45: #{tpu_custom_call.1} parent=0
    _
  %s5 = ssub.s32 1, %s3
  %s6 = scalar_select 0, %s5, %s3
  $region1: #{tpu_custom_call.1} parent=0
    #allocation2 [shape = 'u8[8192]{0}', space=vmem, size = 0x2000, scoped, tag = 'input window, operand 0']
    #allocation3 [shape = 's32[2]{0}', space=sflag, size = 0x8, scoped, tag = 'scoped memory for tpu_custom_call.1']
    #allocation4 [shape = 's32[2]{0}', space=sflag, size = 0x8, scoped, tag = 'scoped memory for tpu_custom_call.1']
    #allocation5 [shape = 'u8[8192]{0}', space=vmem, size = 0x2000, scoped, tag = 'output window, operand 0']
    %7 = vsyncpa [#allocation3], 0
    %s8 = scalar_lea.sflag [#allocation3], 1
    %9 = vsyncpa %s8, 0
    %10 = vsyncpa [#allocation4], 0
    %s11 = scalar_lea.sflag [#allocation4], 1
    %12 = vsyncpa %s11, 0
    loop: start=0, step=1, limit=4
    $region2: #{tpu_custom_call.1} parent=1 // loop_pre_header
      _
    $region3: #{tpu_custom_call.1} parent=1 // loop_header
      %s14 = sphi 0, %s18
      %p15 = scmp.ge.s32.totalorder %s14, 4
      %s21 = sphi 0, %s33
      %s22 = sphi 0, %s29
      %s23 = sphi 0, %s21
      %s24 = sphi 0, %s22
      %s25 = sphi 0, %s23
      %s26 = sphi 0, %s24
      %s38 = sphi 0, %s40
      %s41 = sphi 0, %s38
      %s42 = sphi 0, %s41
      %s58 = sphi 0, %s42
      %s62 = sphi 0, %s62
      %s64 = sphi 0, %s62
      %s65 = sphi 0, %s64
      %s79 = sphi 0, %s65
      %s87 = sphi 0, %s89
      %s90 = sphi 0, %s87
      %s91 = sphi 0, %s90
      %s107 = sphi 0, %s91
    $region4: #{tpu_custom_call.1} parent=1 // loop_header_branch
      %17 = sbr.rel (%p15) target = $region8
    $region5: #{tpu_custom_call.1} parent=1 // loop_body
      %s19 = ssub.s32 %s14, 1
      %s20 = ssub.s32 %s14, 2
      %s27 = sadd.s32 1, %s22
      %p28 = scmp.ge.s32.totalorder %s27, 1
      %s29 = scalar_select %p28, 0, %s27
      %s30 = sadd.s32 1, %s21
      %s31 = scalar_select %p28, %s30, %s21
      %p32 = scmp.ge.s32.totalorder %s31, 2
      %s33 = scalar_select %p32, 0, %s31
      %s34 = ssub.s32 %s21, %s33
      %s35 = ssub.s32 %s22, %s29
      %s36 = sor.u32 %s34, %s35
      %p37 = scmp.eq.s32.totalorder %s36, 0
      %s39 = sadd.s32 %s38, 1
      %s40 = scalar_select %p37, %s38, %s39
      %p43 = pneg %p37
      %p44 = scmp.eq.s32.totalorder %s14, 1
      %p45 = por %p43, %p44
      %p46 = scmp.ne.s32.totalorder %s38, %s41
      %p47 = scmp.eq.s32.totalorder %s14, 0
      %p48 = por %p46, %p47
      %p49 = scmp.ne.s32.totalorder %s38, %s41
      %p50 = scmp.eq.s32.totalorder %s19, 1
      %p51 = por %p49, %p50
      %p52 = scmp.ne.s32.totalorder %s41, %s42
      %p53 = scmp.eq.s32.totalorder %s19, 0
      %p54 = por %p52, %p53
      %p55 = scmp.ne.s32.totalorder %s41, %s42
      %p56 = scmp.eq.s32.totalorder %s20, 1
      %p57 = por %p55, %p56
      %p59 = scmp.ne.s32.totalorder %s42, %s58
      %p60 = scmp.eq.s32.totalorder %s20, 0
      %p61 = por %p59, %p60
      %s63 = sadd.s32 %s62, 1
      %p66 = scmp.eq.s32.totalorder %s14, 1
      %p67 = scmp.ne.s32.totalorder %s62, %s64
      %p68 = scmp.eq.s32.totalorder %s14, 0
      %p69 = por %p67, %p68
      %p70 = scmp.ne.s32.totalorder %s62, %s64
      %p71 = scmp.eq.s32.totalorder %s19, 1
      %p72 = por %p70, %p71
      %p73 = scmp.ne.s32.totalorder %s64, %s65
      %p74 = scmp.eq.s32.totalorder %s19, 0
      %p75 = por %p73, %p74
      %p76 = scmp.ne.s32.totalorder %s64, %s65
      %p77 = scmp.eq.s32.totalorder %s20, 1
      %p78 = por %p76, %p77
      %p80 = scmp.ne.s32.totalorder %s65, %s79
      %p81 = scmp.eq.s32.totalorder %s20, 0
      %p82 = por %p80, %p81
      %s83 = ssub.s32 %s21, %s33
      %s84 = ssub.s32 %s22, %s29
      %s85 = sor.u32 %s83, %s84
      %p86 = scmp.eq.s32.totalorder %s85, 0
      %s88 = sadd.s32 %s87, 1
      %s89 = scalar_select %p86, %s87, %s88
      %p92 = pneg %p86
      %p93 = scmp.eq.s32.totalorder %s14, 1
      %p94 = por %p92, %p93
      %p95 = scmp.ne.s32.totalorder %s87, %s90
      %p96 = scmp.eq.s32.totalorder %s14, 0
      %p97 = por %p95, %p96
      %p98 = scmp.ne.s32.totalorder %s87, %s90
      %p99 = scmp.eq.s32.totalorder %s19, 1
      %p100 = por %p98, %p99
      %p101 = scmp.ne.s32.totalorder %s90, %s91
      %p102 = scmp.eq.s32.totalorder %s19, 0
      %p103 = por %p101, %p102
      %p104 = scmp.ne.s32.totalorder %s90, %s91
      %p105 = scmp.eq.s32.totalorder %s20, 1
      %p106 = por %p104, %p105
      %p108 = scmp.ne.s32.totalorder %s91, %s107
      %p109 = scmp.eq.s32.totalorder %s20, 0
      %p110 = por %p108, %p109
      %p111 = scmp.le.s32.totalorder 1, %s14
      %p112 = scmp.lt.s32.totalorder %s14, 3
      %p113 = pnand %p111, %p112
      %p114 = pneg %p113
      // Predicated region
      $region9: #{tpu_custom_call.1} parent=5 // pred_check
        _
      $region10: #{tpu_custom_call.1} parent=5 // pred_check_branch
        %116 = sbr.rel (%p113) target = $region12
      $region11: #{tpu_custom_call.1} parent=5 // pred_region
        %s117 = ssub.s32 %s14, 1
        // Predicated region
        $region13: #{tpu_custom_call.1} parent=11 // pred_check
          %p118 = pneg %p75
        $region14: #{tpu_custom_call.1} parent=11 // pred_check_branch
          %120 = sbr.rel (%p118) target = $region16
        $region15: #{tpu_custom_call.1} parent=11 // pred_region
          _
        $region16: #{tpu_custom_call.1} parent=11 // pred_fallthru
          _
      $region12: #{tpu_custom_call.1} parent=5 // pred_fallthru
        _
      %p121 = scmp.lt.s32.totalorder %s14, 2
      // Predicated region
      $region17: #{tpu_custom_call.1} parent=5 // pred_check
        %p122 = pneg %p121
      $region18: #{tpu_custom_call.1} parent=5 // pred_check_branch
        %124 = sbr.rel (%p122) target = $region20
      $region19: #{tpu_custom_call.1} parent=5 // pred_region
        // Predicated region
        $region21: #{tpu_custom_call.1} parent=19 // pred_check
          %p125 = pneg %p48
        $region22: #{tpu_custom_call.1} parent=19 // pred_check_branch
          %127 = sbr.rel (%p125) target = $region24
        $region23: #{tpu_custom_call.1} parent=19 // pred_region
          %s128 = sand.u32 %s38, 1
          %s129 = scalar_lea.sflag [#allocation3], %s128
          %s130 = sand.u32 %s38, 1
          %s131 = smul.addr %s130, 8
          %s132 = scalar_lea.vmem [#allocation2], %s131
          %s133 = smul.u32 2, %s22
          %s135 = ssub.s32 128, 128
          %136 = vsyncadd %s129, %s135
          %s137 = smul.addr %s21, 2
          %s138 = sadd.s32 %s133, %s137
          %s139 = smul.addr %s138, 64
          %s140 = scalar_lea.hbm %s0, %s139
          %s142 = sshll.u32 %s132, 4
          %s143 = int_to_ptr.vmem [resolvable:$true] %s142
          %145 = dma.hbm_to_vmem [thread:$0]  %s140, 128, %s143, %s129
        $region24: #{tpu_custom_call.1} parent=19 // pred_fallthru
          _
      $region20: #{tpu_custom_call.1} parent=5 // pred_fallthru
        _
      %p146 = scmp.le.s32.totalorder 1, %s14
      %p147 = scmp.lt.s32.totalorder %s14, 3
      %p148 = pnand %p146, %p147
      %p149 = pneg %p148
      // Predicated region
      $region25: #{tpu_custom_call.1} parent=5 // pred_check
        _
      $region26: #{tpu_custom_call.1} parent=5 // pred_check_branch
        %151 = sbr.rel (%p148) target = $region28
      $region27: #{tpu_custom_call.1} parent=5 // pred_region
        %s152 = ssub.s32 %s14, 1
        %s153 = sand.u32 %s41, 1
        %s154 = scalar_lea.sflag [#allocation3], %s153
        %s155 = sand.u32 %s41, 1
        %s156 = smul.addr %s155, 8
        %s157 = scalar_lea.vmem [#allocation2], %s156
        // Predicated region
        $region29: #{tpu_custom_call.1} parent=27 // pred_check
          %p158 = pneg %p54
        $region30: #{tpu_custom_call.1} parent=27 // pred_check_branch
          %160 = sbr.rel (%p158) target = $region32
        $region31: #{tpu_custom_call.1} parent=27 // pred_region
          %161 = dma.done %s154, 128
        $region32: #{tpu_custom_call.1} parent=27 // pred_fallthru
          _
        %s162 = sand.u32 %s41, 1
        %s163 = scalar_lea.sflag [#allocation3], %s162
        %s164 = sand.u32 %s41, 1
        %s165 = smul.addr %s164, 8
        %s166 = scalar_lea.vmem [#allocation2], %s165
        %p167 = pneg %p54
        %p168 = pneg %p51
        %p169 = pneg %p75
        %p170 = pneg %p72
        %p171 = pneg %p103
        %p172 = pneg %p100
        %s173 = sand.u32 %s90, 1
        %s174 = scalar_lea.sflag [#allocation4], %s173
        %s175 = sand.u32 %s90, 1
        %s176 = smul.addr %s175, 8
        %s177 = scalar_lea.vmem [#allocation5], %s176
        %s178 = smul.u32 2, %s24
        %s179 = smul.u32 2, %s24
        %v180 = vld [vmem:[%s157] sm:$0xff]
        %v181 = vmul.f32 %v180, %v180
        %v183 = vcombine.high %v181, %v181
        %vm185 = vcmask 1043456
        %v186 = vsel %vm185, %v181, 0.0
        %v187 = vrot.slane %v186, 4
        %v188 = vadd.f32 %v186, %v187
        %v189 = vrot.slane %v188, 2
        %v190 = vadd.f32 %v188, %v189
        %v191 = vrot.slane %v190, 1
        %v192 = vadd.f32 %v190, %v191
        %v193 = vsel %vm185, %v183, 0.0
        %v194 = vrot.slane %v193, 4
        %v195 = vadd.f32 %v193, %v194
        %v196 = vrot.slane %v195, 2
        %v197 = vadd.f32 %v195, %v196
        %v198 = vrot.slane %v197, 1
        %v199 = vadd.f32 %v197, %v198
        %v200 = vmax.f32 %v192, 1e-24
        %v201 = vmax.f32 %v199, 1e-24
        %v202 = vrsqrt.pop %v200
        %v203 = vrsqrt.pop %v201
        %v204 = vld [vmem:[%s1] sm:$0xf]
        %206 = vset.pattern.permute.xlu0 0
        %207 = vperm.xlu0 %206, %v204
        %v208 = vpop.permute.xlu0 %207
        %v210 = vmul.f32 %v208, %v202
        %v211 = vmul.f32 %v208, %v203
        %v214 = vcombine.low %v210, %v211
        %v216 = vmul.f32 %v180, %v214
        %217 = vst [vmem:[%s177] sm:$0xff] %v216
        %s218 = sand.u32 %s90, 1
        %s219 = scalar_lea.sflag [#allocation4], %s218
        %s220 = sand.u32 %s90, 1
        %s221 = smul.addr %s220, 8
        %s222 = scalar_lea.vmem [#allocation5], %s221
        // Predicated region
        $region33: #{tpu_custom_call.1} parent=27 // pred_check
          %p223 = pneg %p100
        $region34: #{tpu_custom_call.1} parent=27 // pred_check_branch
          %225 = sbr.rel (%p223) target = $region36
        $region35: #{tpu_custom_call.1} parent=27 // pred_region
          %s226 = smul.u32 2, %s24
          %s228 = ssub.s32 128, 128
          %229 = vsyncadd %s219, %s228
          %s230 = smul.addr %s23, 2
          %s231 = sadd.s32 %s226, %s230
          %s232 = smul.addr %s231, 64
          %s233 = scalar_lea.hbm %s2, %s232
          %s235 = sshll.u32 %s222, 4
          %s236 = int_to_ptr.vmem [resolvable:$true] %s235
          %238 = dma.vmem_to_hbm [thread:$0]  %s236, 128, %s233, %s219
        $region36: #{tpu_custom_call.1} parent=27 // pred_fallthru
          _
      $region28: #{tpu_custom_call.1} parent=5 // pred_fallthru
        _
      %p239 = scmp.le.s32.totalorder 2, %s14
      // Predicated region
      $region37: #{tpu_custom_call.1} parent=5 // pred_check
        %p240 = pneg %p239
      $region38: #{tpu_custom_call.1} parent=5 // pred_check_branch
        %242 = sbr.rel (%p240) target = $region40
      $region39: #{tpu_custom_call.1} parent=5 // pred_region
        %s243 = ssub.s32 %s14, 2
        // Predicated region
        $region41: #{tpu_custom_call.1} parent=39 // pred_check
          %p244 = pneg %p106
        $region42: #{tpu_custom_call.1} parent=39 // pred_check_branch
          %246 = sbr.rel (%p244) target = $region44
        $region43: #{tpu_custom_call.1} parent=39 // pred_region
          %s247 = sand.u32 %s91, 1
          %s248 = scalar_lea.sflag [#allocation4], %s247
          %s249 = sand.u32 %s91, 1
          %s250 = smul.addr %s249, 8
          %s251 = scalar_lea.vmem [#allocation5], %s250
          %252 = dma.done %s248, 128
        $region44: #{tpu_custom_call.1} parent=39 // pred_fallthru
          _
      $region40: #{tpu_custom_call.1} parent=5 // pred_fallthru
        _
    $region6: #{tpu_custom_call.1} parent=1 // loop_footer
      %s18 = sadd.s32 1, %s14
    $region7: #{tpu_custom_call.1} parent=1 // loop_footer_branch
      %13 = sbr.rel target = $region3
    $region8: #{tpu_custom_call.1} parent=1 // loop_exit
      _
    %253 = vsyncpa [#allocation3], 1
    %s254 = scalar_lea.sflag [#allocation3], 1
    %255 = vsyncpa %s254, 1
    %256 = vsyncpa [#allocation4], 1
    %s257 = scalar_lea.sflag [#allocation4], 1
    %258 = vsyncpa %s257, 1

</llo_original>
